<compile_context>
chip_gen: v7x
topology: tpu7x:2x2x1
jax: 0.10.0
libtpu: 0.0.40
codegen_flags: <defaults>
</compile_context>

<pallas_src>
import numpy as np
import jax
import jax.numpy as jnp
from jax import lax
from jax.experimental import pallas as pl
from jax.experimental.pallas import tpu as pltpu

H, W = 5, 62            # conv1 input spatial size (single channel)
H1, W1 = 3, 32          # after AvgPool2d(k=2, s=2, pad=1)
H2, W2 = 2, 17          # after second AvgPool2d(k=2, s=2, pad=1)
C0, C1, C2 = 1, 4, 8
F0 = C0 * H * W         # 310
F1 = C1 * H * W         # 1240
F1P = C1 * H1 * W1      # 384
F2 = C2 * H1 * W1       # 768
FEAT = C2 * H2 * W2     # 272  (matches nn.Linear(272, 256))
FC1, FC2, NCLS = 256, 128, 4
OUT_PAD = 128           # lane-dense output; logits live in [:, :NCLS]


def _round_up(n, m):
    return ((n + m - 1) // m) * m


def _conv_matrix(w, hs, ws):
    """w: (OC, IC, 3, 3) conv weight (stride=1, pad=1) ->
    K: (IC*hs*ws, OC*hs*ws) such that x_flat @ K == conv2d(x, w) flattened.
    Both sides use channel-major (c, h, w) flattening (PyTorch order)."""
    oc, ic = w.shape[0], w.shape[1]
    di = np.arange(hs)[:, None] - np.arange(hs)[None, :]   # i_in - i_out
    dj = np.arange(ws)[:, None] - np.arange(ws)[None, :]   # j_in - j_out
    vi, vj = np.abs(di) <= 1, np.abs(dj) <= 1
    ki = np.where(vi, di + 1, 0)                            # kernel row index
    kj = np.where(vj, dj + 1, 0)                            # kernel col index
    g = w[:, :, ki, :][:, :, :, :, kj]                      # (OC, IC, hs, hs, ws, ws)
    mask = jnp.asarray((vi[:, :, None, None] & vj[None, None, :, :]).astype(np.float32))
    g = g * mask[None, None]
    # -> (IC, i_in, j_in, OC, i_out, j_out)
    return jnp.transpose(g, (1, 2, 4, 0, 3, 5)).reshape(ic * hs * ws, oc * hs * ws)


def _pool_matrix(c, hs, ws, hp, wp):
    """AvgPool2d(k=2, s=2, pad=1, count_include_pad=True) as a block-diagonal
    (c*hs*ws, c*hp*wp) 0/0.25 matrix (channel-major flatten on both sides)."""
    rp = np.zeros((hs, hp), np.float32)
    for o in range(hp):
        for r in (2 * o - 1, 2 * o):
            if 0 <= r < hs:
                rp[r, o] = 1.0
    cp = np.zeros((ws, wp), np.float32)
    for o in range(wp):
        for q in (2 * o - 1, 2 * o):
            if 0 <= q < ws:
                cp[q, o] = 1.0
    sp = np.kron(rp, cp) * 0.25
    out = np.zeros((c * hs * ws, c * hp * wp), np.float32)
    for ch in range(c):
        out[ch * hs * ws:(ch + 1) * hs * ws, ch * hp * wp:(ch + 1) * hp * wp] = sp
    return out


def cnn_kernel(x_ref, wa_ref, ba_ref, w2_ref, b2_ref, w3_ref, b3_ref, out_ref):
    def dot(a, b):
        return jnp.dot(a, b, preferred_element_type=jnp.float32)

    x = x_ref[...]                                                   # (TB, 310)
    h1 = jnp.maximum(dot(x, wa_ref[...]) + ba_ref[...], 0.0)        # (TB, 256)
    h2 = jnp.maximum(dot(h1, w2_ref[...]) + b2_ref[...], 0.0)       # (TB, 128)
    out_ref[...] = dot(h2, w3_ref[...]) + b3_ref[...]               # (TB, 128)


def cnn_forward_pallas(x, p, tb=512):
    """x: (B, 1, 5, 62) float32 NCHW (PyTorch convention). Returns (B, 4)."""
    B = x.shape[0]
    xf = x.reshape(B, F0).astype(jnp.float32)        # channel-major flatten (C=1)

    TB = min(tb, _round_up(B, 8))                    # batch tile (multiple of 8)
    Bp = _round_up(B, TB)
    if Bp != B:
        xf = jnp.pad(xf, ((0, Bp - B), (0, 0)))

    # --- batch-independent weight composition (conv/pool/fc1 are all linear) ---
    hi = lax.Precision.HIGHEST
    k1 = _conv_matrix(p["w1"], H, W)                                 # (310, 1240)
    k2 = _conv_matrix(p["w2"], H1, W1)                               # (384, 768)
    p1 = jnp.asarray(_pool_matrix(C1, H, W, H1, W1))                 # (1240, 384)
    p2 = jnp.asarray(_pool_matrix(C2, H1, W1, H2, W2))               # (768, 272)
    bb1 = jnp.repeat(p["b1"], H * W).reshape(1, F1)                  # conv1 bias, flattened
    bb2 = jnp.repeat(p["b2"], H1 * W1).reshape(1, F2)                # conv2 bias, flattened

    m1 = jnp.dot(k1, p1, precision=hi)                               # conv1+pool1  (310, 384)
    m2 = jnp.dot(k2, p2, precision=hi)                               # conv2+pool2  (384, 272)
    c1 = jnp.dot(bb1, p1, precision=hi)                              # (1, 384)
    c2 = jnp.dot(bb2, p2, precision=hi)                              # (1, 272)
    pre_w = jnp.dot(m1, m2, precision=hi)                            # x_flat -> features (310, 272)
    pre_b = jnp.dot(c1, m2, precision=hi) + c2                       # (1, 272)

    wa = jnp.dot(pre_w, p["wfc1"], precision=hi)                     # (310, 256)
    ba = jnp.dot(pre_b, p["wfc1"], precision=hi) + p["bfc1"].reshape(1, FC1)
    bfc2 = p["bfc2"].reshape(1, FC2)
    wfc3 = jnp.zeros((FC2, OUT_PAD), jnp.float32).at[:, :NCLS].set(p["wfc3"])
    bfc3 = jnp.zeros((1, OUT_PAD), jnp.float32).at[:, :NCLS].set(p["bfc3"].reshape(1, NCLS))

    weights = (wa, ba, p["wfc2"], bfc2, wfc3, bfc3)

    def const2d(a):
        return pl.BlockSpec(a.shape, lambda i: (0, 0))

    out = pl.pallas_call(
        cnn_kernel,
        out_shape=jax.ShapeDtypeStruct((Bp, OUT_PAD), jnp.float32),
        grid_spec=pltpu.PrefetchScalarGridSpec(
            num_scalar_prefetch=0,
            grid=(Bp // TB,),
            in_specs=[pl.BlockSpec((TB, F0), lambda i: (i, 0))]
                     + [const2d(w) for w in weights],
            out_specs=pl.BlockSpec((TB, OUT_PAD), lambda i: (i, 0)),
        ),
        compiler_params=pltpu.CompilerParams(dimension_semantics=("parallel",)),
    )(xf, *weights)
    return out[:B, :NCLS]


def reference_forward(x, p):
    """Pure-JAX reference mirroring the PyTorch module (HIGHEST precision)."""
    hi = lax.Precision.HIGHEST

    def conv(inp, w, b):
        y = lax.conv_general_dilated(
            inp, w, (1, 1), ((1, 1), (1, 1)),
            dimension_numbers=("NCHW", "OIHW", "NCHW"), precision=hi)
        return y + b[None, :, None, None]

    def avgpool(inp):
        s = lax.reduce_window(inp, 0.0, lax.add, (1, 1, 2, 2), (1, 1, 2, 2),
                              ((0, 0), (0, 0), (1, 1), (1, 1)))
        return s * 0.25                               # count_include_pad=True

    y = avgpool(conv(x, p["w1"], p["b1"]))
    y = avgpool(conv(y, p["w2"], p["b2"]))
    f = y.reshape(x.shape[0], -1)
    h = jnp.maximum(jnp.dot(f, p["wfc1"], precision=hi) + p["bfc1"], 0.0)
    h = jnp.maximum(jnp.dot(h, p["wfc2"], precision=hi) + p["bfc2"], 0.0)
    return jnp.dot(h, p["wfc3"], precision=hi) + p["bfc3"]


def init_params(key):
    ks = jax.random.split(key, 10)
    return {
        "w1": 0.2 * jax.random.normal(ks[0], (C1, 1, 3, 3), jnp.float32),
        "b1": 0.1 * jax.random.normal(ks[1], (C1,), jnp.float32),
        "w2": 0.1 * jax.random.normal(ks[2], (C2, C1, 3, 3), jnp.float32),
        "b2": 0.1 * jax.random.normal(ks[3], (C2,), jnp.float32),
        "wfc1": 0.05 * jax.random.normal(ks[4], (FEAT, FC1), jnp.float32),
        "bfc1": 0.05 * jax.random.normal(ks[5], (FC1,), jnp.float32),
        "wfc2": 0.05 * jax.random.normal(ks[6], (FC1, FC2), jnp.float32),
        "bfc2": 0.05 * jax.random.normal(ks[7], (FC2,), jnp.float32),
        "wfc3": 0.05 * jax.random.normal(ks[8], (FC2, NCLS), jnp.float32),
        "bfc3": 0.05 * jax.random.normal(ks[9], (NCLS,), jnp.float32),
    }


if __name__ == "__main__":
    key = jax.random.PRNGKey(0)
    pkey, xkey1, xkey2 = jax.random.split(key, 3)
    params = init_params(pkey)

    fwd = jax.jit(cnn_forward_pallas, static_argnames=("tb",))

    # Small demo batch (single grid step).
    x_small = jax.random.normal(xkey1, (2, 1, H, W), jnp.float32)   # NCHW
    y = jax.block_until_ready(fwd(x_small, params))
    y_ref = jax.block_until_ready(reference_forward(x_small, params))
    assert y.shape == (2, NCLS)
    np.testing.assert_allclose(np.asarray(y), np.asarray(y_ref), rtol=2e-2, atol=2e-2)

    # Larger batch exercising multiple grid steps + batch padding.
    x_big = jax.random.normal(xkey2, (37, 1, H, W), jnp.float32)
    y2 = jax.block_until_ready(fwd(x_big, params, tb=16))
    y2_ref = jax.block_until_ready(reference_forward(x_big, params))
    assert y2.shape == (37, NCLS)
    np.testing.assert_allclose(np.asarray(y2), np.asarray(y2_ref), rtol=2e-2, atol=2e-2)

    print("KERNEL_OK")
</pallas_src>

<mosaic_0001>
module attributes {stable_mosaic.version = 11 : i64} {
  func.func @cnn_kernel(%arg0: i32, %arg1: memref<8x310xf32, #tpu.memory_space<vmem>>, %arg2: memref<310x256xf32, #tpu.memory_space<vmem>>, %arg3: memref<1x256xf32, #tpu.memory_space<vmem>>, %arg4: memref<256x128xf32, #tpu.memory_space<vmem>>, %arg5: memref<1x128xf32, #tpu.memory_space<vmem>>, %arg6: memref<128x128xf32, #tpu.memory_space<vmem>>, %arg7: memref<1x128xf32, #tpu.memory_space<vmem>>, %arg8: memref<8x128xf32, #tpu.memory_space<vmem>>) attributes {dimension_semantics = [#tpu.dimension_semantics<parallel>], iteration_bounds = array<i64: 1>, scalar_prefetch = 0 : i64, scratch_operands = 0 : i64, tpu.core_type = #tpu.core_type<tc>, window_params = [{transform_indices = @transform_0, window_bounds = array<i64: 8, 310>}, {pipeline_mode = #tpu.pipeline_mode<synchronous>, transform_indices = @transform_1, window_bounds = array<i64: 310, 256>}, {pipeline_mode = #tpu.pipeline_mode<synchronous>, transform_indices = @transform_2, window_bounds = array<i64: 1, 256>}, {pipeline_mode = #tpu.pipeline_mode<synchronous>, transform_indices = @transform_3, window_bounds = array<i64: 256, 128>}, {pipeline_mode = #tpu.pipeline_mode<synchronous>, transform_indices = @transform_4, window_bounds = array<i64: 1, 128>}, {pipeline_mode = #tpu.pipeline_mode<synchronous>, transform_indices = @transform_5, window_bounds = array<i64: 128, 128>}, {pipeline_mode = #tpu.pipeline_mode<synchronous>, transform_indices = @transform_6, window_bounds = array<i64: 1, 128>}, {transform_indices = @transform_7, window_bounds = array<i64: 8, 128>}]} {
    %c0 = arith.constant 0 : index
    %c0_0 = arith.constant 0 : index
    %0 = vector.load %arg1[%c0, %c0_0] : memref<8x310xf32, #tpu.memory_space<vmem>>, vector<8x310xf32>
    %c0_1 = arith.constant 0 : index
    %c0_2 = arith.constant 0 : index
    %1 = vector.load %arg2[%c0_1, %c0_2] : memref<310x256xf32, #tpu.memory_space<vmem>>, vector<310x256xf32>
    %cst = arith.constant dense<0.000000e+00> : vector<8x256xf32>
    %2 = tpu.matmul %0, %1, %cst {dimension_numbers = #tpu.dot_dimension_numbers<[1], [0], [0], [1], [0, 0, 1, 1], [], []>} : vector<8x310xf32>, vector<310x256xf32>, vector<8x256xf32> -> vector<8x256xf32>
    %c0_3 = arith.constant 0 : index
    %c0_4 = arith.constant 0 : index
    %3 = vector.load %arg3[%c0_3, %c0_4] : memref<1x256xf32, #tpu.memory_space<vmem>>, vector<1x256xf32>
    %4 = vector.broadcast %3 : vector<1x256xf32> to vector<8x256xf32>
    %5 = arith.addf %2, %4 : vector<8x256xf32>
    %cst_5 = arith.constant 0.000000e+00 : f32
    %6 = vector.broadcast %cst_5 : f32 to vector<8x256xf32>
    %7 = arith.maximumf %5, %6 : vector<8x256xf32>
    %c0_6 = arith.constant 0 : index
    %c0_7 = arith.constant 0 : index
    %8 = vector.load %arg4[%c0_6, %c0_7] : memref<256x128xf32, #tpu.memory_space<vmem>>, vector<256x128xf32>
    %cst_8 = arith.constant dense<0.000000e+00> : vector<8x128xf32>
    %9 = tpu.matmul %7, %8, %cst_8 {dimension_numbers = #tpu.dot_dimension_numbers<[1], [0], [0], [1], [0, 0, 1, 1], [], []>} : vector<8x256xf32>, vector<256x128xf32>, vector<8x128xf32> -> vector<8x128xf32>
    %c0_9 = arith.constant 0 : index
    %c0_10 = arith.constant 0 : index
    %10 = vector.load %arg5[%c0_9, %c0_10] : memref<1x128xf32, #tpu.memory_space<vmem>>, vector<1x128xf32>
    %11 = vector.broadcast %10 : vector<1x128xf32> to vector<8x128xf32>
    %12 = arith.addf %9, %11 : vector<8x128xf32>
    %cst_11 = arith.constant 0.000000e+00 : f32
    %13 = vector.broadcast %cst_11 : f32 to vector<8x128xf32>
    %14 = arith.maximumf %12, %13 : vector<8x128xf32>
    %c0_12 = arith.constant 0 : index
    %c0_13 = arith.constant 0 : index
    %15 = vector.load %arg6[%c0_12, %c0_13] : memref<128x128xf32, #tpu.memory_space<vmem>>, vector<128x128xf32>
    %cst_14 = arith.constant dense<0.000000e+00> : vector<8x128xf32>
    %16 = tpu.matmul %14, %15, %cst_14 {dimension_numbers = #tpu.dot_dimension_numbers<[1], [0], [0], [1], [0, 0, 1, 1], [], []>} : vector<8x128xf32>, vector<128x128xf32>, vector<8x128xf32> -> vector<8x128xf32>
    %c0_15 = arith.constant 0 : index
    %c0_16 = arith.constant 0 : index
    %17 = vector.load %arg7[%c0_15, %c0_16] : memref<1x128xf32, #tpu.memory_space<vmem>>, vector<1x128xf32>
    %18 = vector.broadcast %17 : vector<1x128xf32> to vector<8x128xf32>
    %19 = arith.addf %16, %18 : vector<8x128xf32>
    %c0_17 = arith.constant 0 : index
    %c0_18 = arith.constant 0 : index
    %20 = vector.load %arg8[%c0_17, %c0_18] : memref<8x128xf32, #tpu.memory_space<vmem>>, vector<8x128xf32>
    tpu.vector_store %arg8[%c0_17, %c0_18], %19 {strides = array<i32>} : memref<8x128xf32, #tpu.memory_space<vmem>>, vector<8x128xf32>,
    return
  }
  func.func @transform_0(%arg0: i32) -> (i32, i32) {
    %c0_i32 = arith.constant 0 : i32
    %c0_i32_0 = arith.constant 0 : i32
    return %arg0, %c0_i32 : i32, i32
  }
  func.func @transform_1(%arg0: i32) -> (i32, i32) {
    %c0_i32 = arith.constant 0 : i32
    %c0_i32_0 = arith.constant 0 : i32
    %c0_i32_1 = arith.constant 0 : i32
    return %c0_i32, %c0_i32_0 : i32, i32
  }
  func.func @transform_2(%arg0: i32) -> (i32, i32) {
    %c0_i32 = arith.constant 0 : i32
    %c0_i32_0 = arith.constant 0 : i32
    %c0_i32_1 = arith.constant 0 : i32
    return %c0_i32, %c0_i32_0 : i32, i32
  }
  func.func @transform_3(%arg0: i32) -> (i32, i32) {
    %c0_i32 = arith.constant 0 : i32
    %c0_i32_0 = arith.constant 0 : i32
    %c0_i32_1 = arith.constant 0 : i32
    return %c0_i32, %c0_i32_0 : i32, i32
  }
  func.func @transform_4(%arg0: i32) -> (i32, i32) {
    %c0_i32 = arith.constant 0 : i32
    %c0_i32_0 = arith.constant 0 : i32
    %c0_i32_1 = arith.constant 0 : i32
    return %c0_i32, %c0_i32_0 : i32, i32
  }
  func.func @transform_5(%arg0: i32) -> (i32, i32) {
    %c0_i32 = arith.constant 0 : i32
    %c0_i32_0 = arith.constant 0 : i32
    %c0_i32_1 = arith.constant 0 : i32
    return %c0_i32, %c0_i32_0 : i32, i32
  }
  func.func @transform_6(%arg0: i32) -> (i32, i32) {
    %c0_i32 = arith.constant 0 : i32
    %c0_i32_0 = arith.constant 0 : i32
    %c0_i32_1 = arith.constant 0 : i32
    return %c0_i32, %c0_i32_0 : i32, i32
  }
  func.func @transform_7(%arg0: i32) -> (i32, i32) {
    %c0_i32 = arith.constant 0 : i32
    %c0_i32_0 = arith.constant 0 : i32
    return %arg0, %c0_i32 : i32, i32
  }
}

</mosaic_0001>

<llo_original>
// kernel: cnn_forward_pallas.1
$region0: #{cnn_forward_pallas.1}
  #allocation0 [shape = 'u32[]', space=smem, size = 0x4, offset = 0x4, fixed_abs, tag = 'smem constant byte address 0x4 - core index']
  #allocation1 [shape = 'u32[144,128]{1,0:T(1,128)}', space=vmem, size = 0x12000, scoped, tag = 'internal scratch']
  %s0 = inlined_call_operand.vmem [shape: f32[8,310], index: 0, kind: input, shape index: {}]
  %s1 = inlined_call_operand.vmem [shape: f32[310,256], index: 1, kind: input, shape index: {}]
  %s2 = inlined_call_operand.vmem [shape: f32[1,256], index: 2, kind: input, shape index: {}]
  %s3 = inlined_call_operand.vmem [shape: f32[256,128], index: 3, kind: input, shape index: {}]
  %s4 = inlined_call_operand.vmem [shape: f32[1,128], index: 4, kind: input, shape index: {}]
  %s5 = inlined_call_operand.vmem [shape: f32[128,128], index: 5, kind: input, shape index: {}]
  %s6 = inlined_call_operand.vmem [shape: f32[1,128], index: 6, kind: input, shape index: {}]
  %s7 = inlined_call_operand.vmem [shape: f32[8,128], index: 7, kind: output, shape index: {}]
  %s8 = sld [smem:[#allocation0]]
  $region38: #{cnn_forward_pallas.1} parent=0
    _
  %s10 = ssub.s32 1, %s8
  %s11 = scalar_select 0, %s10, %s8
  // Predicated region
  $region2: #{cnn_forward_pallas.1} parent=0 // pred_check
    _
  $region3: #{cnn_forward_pallas.1} parent=0 // pred_check_branch
    %13 = sbr.rel (0) target = $region5
  $region4: #{cnn_forward_pallas.1} parent=0 // pred_region
    _
  $region5: #{cnn_forward_pallas.1} parent=0 // pred_fallthru
    _
  // Predicated region
  $region6: #{cnn_forward_pallas.1} parent=0 // pred_check
    _
  $region7: #{cnn_forward_pallas.1} parent=0 // pred_check_branch
    %15 = sbr.rel (0) target = $region9
  $region8: #{cnn_forward_pallas.1} parent=0 // pred_region
    _
  $region9: #{cnn_forward_pallas.1} parent=0 // pred_fallthru
    _
  // Predicated region
  $region10: #{cnn_forward_pallas.1} parent=0 // pred_check
    _
  $region11: #{cnn_forward_pallas.1} parent=0 // pred_check_branch
    %17 = sbr.rel (0) target = $region13
  $region12: #{cnn_forward_pallas.1} parent=0 // pred_region
    _
  $region13: #{cnn_forward_pallas.1} parent=0 // pred_fallthru
    _
  // Predicated region
  $region14: #{cnn_forward_pallas.1} parent=0 // pred_check
    _
  $region15: #{cnn_forward_pallas.1} parent=0 // pred_check_branch
    %19 = sbr.rel (0) target = $region17
  $region16: #{cnn_forward_pallas.1} parent=0 // pred_region
    _
  $region17: #{cnn_forward_pallas.1} parent=0 // pred_fallthru
    _
  // Predicated region
  $region18: #{cnn_forward_pallas.1} parent=0 // pred_check
    _
  $region19: #{cnn_forward_pallas.1} parent=0 // pred_check_branch
    %21 = sbr.rel (0) target = $region21
  $region20: #{cnn_forward_pallas.1} parent=0 // pred_region
    _
  $region21: #{cnn_forward_pallas.1} parent=0 // pred_fallthru
    _
  // Predicated region
  $region22: #{cnn_forward_pallas.1} parent=0 // pred_check
    _
  $region23: #{cnn_forward_pallas.1} parent=0 // pred_check_branch
    %23 = sbr.rel (0) target = $region25
  $region24: #{cnn_forward_pallas.1} parent=0 // pred_region
    _
  $region25: #{cnn_forward_pallas.1} parent=0 // pred_fallthru
    _
  // Predicated region
  $region26: #{cnn_forward_pallas.1} parent=0 // pred_check
    _
  $region27: #{cnn_forward_pallas.1} parent=0 // pred_check_branch
    %25 = sbr.rel (0) target = $region29
  $region28: #{cnn_forward_pallas.1} parent=0 // pred_region
    _
  $region29: #{cnn_forward_pallas.1} parent=0 // pred_fallthru
    _
  %v26 = vld [vmem:[%s0] sm:$0xff]
  %v27 = vld [vmem:[%s0 + $0x8] sm:$0xff]
  %v28 = vld [vmem:[%s0 + $0x10] sm:$0xff]
  %v29 = vld [vmem:[%s1] sm:$0xff]
  %v30 = vld [vmem:[%s1 + $0x8] sm:$0xff]
  %v31 = vld [vmem:[%s1 + $0x10] sm:$0xff]
  %v32 = vld [vmem:[%s1 + $0x18] sm:$0xff]
  %v33 = vld [vmem:[%s1 + $0x20] sm:$0xff]
  %v34 = vld [vmem:[%s1 + $0x28] sm:$0xff]
  %v35 = vld [vmem:[%s1 + $0x30] sm:$0xff]
  %v36 = vld [vmem:[%s1 + $0x38] sm:$0xff]
  %v37 = vld [vmem:[%s1 + $0x40] sm:$0xff]
  %v38 = vld [vmem:[%s1 + $0x48] sm:$0xff]
  %v39 = vld [vmem:[%s1 + $0x50] sm:$0xff]
  %v40 = vld [vmem:[%s1 + $0x58] sm:$0xff]
  %v41 = vld [vmem:[%s1 + $0x60] sm:$0xff]
  %v42 = vld [vmem:[%s1 + $0x68] sm:$0xff]
  %v43 = vld [vmem:[%s1 + $0x70] sm:$0xff]
  %v44 = vld [vmem:[%s1 + $0x78] sm:$0xff]
  %v45 = vld [vmem:[%s1 + $0x80] sm:$0xff]
  %v46 = vld [vmem:[%s1 + $0x88] sm:$0xff]
  %v47 = vld [vmem:[%s1 + $0x90] sm:$0xff]
  %v48 = vld [vmem:[%s1 + $0x98] sm:$0xff]
  %v49 = vld [vmem:[%s1 + $0xa0] sm:$0xff]
  %v50 = vld [vmem:[%s1 + $0xa8] sm:$0xff]
  %v51 = vld [vmem:[%s1 + $0xb0] sm:$0xff]
  %v52 = vld [vmem:[%s1 + $0xb8] sm:$0xff]
  %v53 = vld [vmem:[%s1 + $0xc0] sm:$0xff]
  %v54 = vld [vmem:[%s1 + $0xc8] sm:$0xff]
  %v55 = vld [vmem:[%s1 + $0xd0] sm:$0xff]
  %v56 = vld [vmem:[%s1 + $0xd8] sm:$0xff]
  %v57 = vld [vmem:[%s1 + $0xe0] sm:$0xff]
  %v58 = vld [vmem:[%s1 + $0xe8] sm:$0xff]
  %v59 = vld [vmem:[%s1 + $0xf0] sm:$0xff]
  %v60 = vld [vmem:[%s1 + $0xf8] sm:$0xff]
  %v61 = vld [vmem:[%s1 + $0x100] sm:$0xff]
  %v62 = vld [vmem:[%s1 + $0x108] sm:$0xff]
  %v63 = vld [vmem:[%s1 + $0x110] sm:$0xff]
  %v64 = vld [vmem:[%s1 + $0x118] sm:$0xff]
  %v65 = vld [vmem:[%s1 + $0x120] sm:$0xff]
  %v66 = vld [vmem:[%s1 + $0x128] sm:$0xff]
  %v67 = vld [vmem:[%s1 + $0x130] sm:$0xff]
  %v68 = vld [vmem:[%s1 + $0x138] sm:$0xff]
  %v69 = vld [vmem:[%s1 + $0x140] sm:$0xff]
  %v70 = vld [vmem:[%s1 + $0x148] sm:$0xff]
  %v71 = vld [vmem:[%s1 + $0x150] sm:$0xff]
  %v72 = vld [vmem:[%s1 + $0x158] sm:$0xff]
  %v73 = vld [vmem:[%s1 + $0x160] sm:$0xff]
  %v74 = vld [vmem:[%s1 + $0x168] sm:$0xff]
  %v75 = vld [vmem:[%s1 + $0x170] sm:$0xff]
  %v76 = vld [vmem:[%s1 + $0x178] sm:$0xff]
  %v77 = vld [vmem:[%s1 + $0x180] sm:$0xff]
  %v78 = vld [vmem:[%s1 + $0x188] sm:$0xff]
  %v79 = vld [vmem:[%s1 + $0x190] sm:$0xff]
  %v80 = vld [vmem:[%s1 + $0x198] sm:$0xff]
  %v81 = vld [vmem:[%s1 + $0x1a0] sm:$0xff]
  %v82 = vld [vmem:[%s1 + $0x1a8] sm:$0xff]
  %v83 = vld [vmem:[%s1 + $0x1b0] sm:$0xff]
  %v84 = vld [vmem:[%s1 + $0x1b8] sm:$0xff]
  %v85 = vld [vmem:[%s1 + $0x1c0] sm:$0xff]
  %v86 = vld [vmem:[%s1 + $0x1c8] sm:$0xff]
  %v87 = vld [vmem:[%s1 + $0x1d0] sm:$0xff]
  %v88 = vld [vmem:[%s1 + $0x1d8] sm:$0xff]
  %v89 = vld [vmem:[%s1 + $0x1e0] sm:$0xff]
  %v90 = vld [vmem:[%s1 + $0x1e8] sm:$0xff]
  %v91 = vld [vmem:[%s1 + $0x1f0] sm:$0xff]
  %v92 = vld [vmem:[%s1 + $0x1f8] sm:$0xff]
  %v93 = vld [vmem:[%s1 + $0x200] sm:$0xff]
  %v94 = vld [vmem:[%s1 + $0x208] sm:$0xff]
  %v95 = vld [vmem:[%s1 + $0x210] sm:$0xff]
  %v96 = vld [vmem:[%s1 + $0x218] sm:$0xff]
  %v97 = vld [vmem:[%s1 + $0x220] sm:$0xff]
  %v98 = vld [vmem:[%s1 + $0x228] sm:$0xff]
  %v99 = vld [vmem:[%s1 + $0x230] sm:$0xff]
  %v100 = vld [vmem:[%s1 + $0x238] sm:$0xff]
  %v101 = vld [vmem:[%s1 + $0x240] sm:$0xff]
  %v102 = vld [vmem:[%s1 + $0x248] sm:$0xff]
  %v103 = vld [vmem:[%s1 + $0x250] sm:$0xff]
  %v104 = vld [vmem:[%s1 + $0x258] sm:$0xff]
  %v105 = vld [vmem:[%s1 + $0x260] sm:$0x3f]
  %v106 = vld [vmem:[%s1 + $0x268] sm:$0x3f]
  %v107 = vld [vmem:[%s2] sm:$0x3]
  %v109 = vlaneseq
  %v110 = vshrl.u32 %v109, 7
  %v111 = vsub.s32 0, %v110
  %v112 = vrot.slane %v107, %v111
  %v113 = vlaneseq
  %v114 = vshrl.u32 %v113, 7
  %v115 = vsub.s32 1, %v114
  %v116 = vrot.slane %v107, %v115
  %vm119 = vcmask 441344
  %v121 = vsel %vm119, %v28, 0
  %vm123 = vcmask 1045504
  %v125 = vsel %vm123, %v105, 0
  %v128 = vsel %vm123, %v106, 0
  %130 = vmatprep.subr.mxu0 %v30
  %131 = vmatpush1.msra.mxu0 %v29
  %132 = vmatprep.subr.mxu0 %v32
  %133 = vmatpush1.msra.mxu0 %v31
  %134 = vmatprep.subr.mxu0 %v34
  %135 = vmatpush1.msra.mxu0 %v33
  %136 = vmatprep.subr.mxu0 %v36
  %137 = vmatpush1.msra.mxu0 %v35
  %138 = vmatprep.subr.mxu0 %v38
  %139 = vmatpush1.msra.mxu0 %v37
  %140 = vmatprep.subr.mxu0 %v40
  %141 = vmatpush1.msra.mxu0 %v39
  %142 = vmatprep.subr.mxu0 %v42
  %143 = vmatpush1.msra.mxu0 %v41
  %144 = vmatprep.subr.mxu0 %v44
  %145 = vmatpush1.msra.mxu0 %v43
  %146 = vmatprep.subr.mxu0 %v46
  %147 = vmatpush1.msra.mxu0 %v45
  %148 = vmatprep.subr.mxu0 %v48
  %149 = vmatpush1.msra.mxu0 %v47
  %150 = vmatprep.subr.mxu0 %v50
  %151 = vmatpush1.msra.mxu0 %v49
  %152 = vmatprep.subr.mxu0 %v52
  %153 = vmatpush1.msra.mxu0 %v51
  %154 = vmatprep.subr.mxu0 %v54
  %155 = vmatpush1.msra.mxu0 %v53
  %156 = vmatprep.subr.mxu0 %v56
  %157 = vmatpush1.msra.mxu0 %v55
  %158 = vmatprep.subr.mxu0 %v58
  %159 = vmatpush1.msra.mxu0 %v57
  %160 = vmatprep.subr.mxu0 %v60
  %161 = vmatpush1.msra.mxu0 %v59
  %162 = vmatprep.subr.mxu0 %v62
  %163 = vmatpush1.msra.mxu0 %v61
  %164 = vmatprep.subr.mxu0 %v64
  %165 = vmatpush1.msra.mxu0 %v63
  %166 = vmatprep.subr.mxu0 %v66
  %167 = vmatpush1.msra.mxu0 %v65
  %168 = vmatprep.subr.mxu0 %v68
  %169 = vmatpush1.msra.mxu0 %v67
  %170 = vmatprep.subr.mxu0 %v70
  %171 = vmatpush1.msra.mxu0 %v69
  %172 = vmatprep.subr.mxu0 %v72
  %173 = vmatpush1.msra.mxu0 %v71
  %174 = vmatprep.subr.mxu0 %v74
  %175 = vmatpush1.msra.mxu0 %v73
  %176 = vmatprep.subr.mxu0 %v76
  %177 = vmatpush1.msra.mxu0 %v75
  %178 = vmatprep.subr.mxu0 %v78
  %179 = vmatpush1.msra.mxu0 %v77
  %180 = vmatprep.subr.mxu0 %v80
  %181 = vmatpush1.msra.mxu0 %v79
  %182 = vmatprep.subr.mxu0 %v82
  %183 = vmatpush1.msra.mxu0 %v81
  %184 = vmatprep.subr.mxu0 %v84
  %185 = vmatpush1.msra.mxu0 %v83
  %186 = vmatprep.subr.mxu0 %v86
  %187 = vmatpush1.msra.mxu0 %v85
  %188 = vmatprep.subr.mxu0 %v88
  %189 = vmatpush1.msra.mxu0 %v87
  %190 = vmatprep.subr.mxu0 %v90
  %191 = vmatpush1.msra.mxu0 %v89
  %192 = vmatprep.subr.mxu0 %v92
  %193 = vmatpush1.msra.mxu0 %v91
  %194 = vmatprep.mubr.f32.mxu0 %v27
  %195 = vmatmul.mubr.f32.gmra.mrb[0].mxu0 %v26
  %v196 = vpop.f32.mrb[0].mxu0
  %v197 = vadd.f32 %v112, %v196
  %v198 = vpop.f32.mrb[0].mxu0
  %v199 = vadd.f32 %v116, %v198
  %200 = vdwg.mxu0
  %201 = vmatprep.subr.mxu0 %v94
  %202 = vmatpush1.msra.mxu0 %v93
  %203 = vmatprep.subr.mxu0 %v96
  %204 = vmatpush1.msra.mxu0 %v95
  %205 = vmatprep.subr.mxu0 %v98
  %206 = vmatpush1.msra.mxu0 %v97
  %207 = vmatprep.subr.mxu0 %v100
  %208 = vmatpush1.msra.mxu0 %v99
  %209 = vmatprep.subr.mxu0 %v102
  %210 = vmatpush1.msra.mxu0 %v101
  %211 = vmatprep.subr.mxu0 %v104
  %212 = vmatpush1.msra.mxu0 %v103
  %213 = vmatprep.subr.mxu0 %v128
  %214 = vmatpush1.msra.mxu0 %v125
  %215 = vmatprep.subr.mxu0 0.0
  %216 = vmatpush1.msra.mxu0 0.0
  %217 = vmatprep.subr.mxu0 0.0
  %218 = vmatpush1.msra.mxu0 0.0
  %219 = vmatprep.subr.mxu0 0.0
  %220 = vmatpush1.msra.mxu0 0.0
  %221 = vmatprep.subr.mxu0 0.0
  %222 = vmatpush1.msra.mxu0 0.0
  %223 = vmatprep.subr.mxu0 0.0
  %224 = vmatpush1.msra.mxu0 0.0
  %225 = vmatprep.subr.mxu0 0.0
  %226 = vmatpush1.msra.mxu0 0.0
  %227 = vmatprep.subr.mxu0 0.0
  %228 = vmatpush1.msra.mxu0 0.0
  %229 = vmatprep.subr.mxu0 0.0
  %230 = vmatpush1.msra.mxu0 0.0
  %231 = vmatprep.subr.mxu0 0.0
  %232 = vmatpush1.msra.mxu0 0.0
  %233 = vmatprep.subr.mxu0 0.0
  %234 = vmatpush1.msra.mxu0 0.0
  %235 = vmatprep.subr.mxu0 0.0
  %236 = vmatpush1.msra.mxu0 0.0
  %237 = vmatprep.subr.mxu0 0.0
  %238 = vmatpush1.msra.mxu0 0.0
  %239 = vmatprep.subr.mxu0 0.0
  %240 = vmatpush1.msra.mxu0 0.0
  %241 = vmatprep.subr.mxu0 0.0
  %242 = vmatpush1.msra.mxu0 0.0
  %243 = vmatprep.subr.mxu0 0.0
  %244 = vmatpush1.msra.mxu0 0.0
  %245 = vmatprep.subr.mxu0 0.0
  %246 = vmatpush1.msra.mxu0 0.0
  %247 = vmatprep.subr.mxu0 0.0
  %248 = vmatpush1.msra.mxu0 0.0
  %249 = vmatprep.subr.mxu0 0.0
  %250 = vmatpush1.msra.mxu0 0.0
  %251 = vmatprep.subr.mxu0 0.0
  %252 = vmatpush1.msra.mxu0 0.0
  %253 = vmatprep.subr.mxu0 0.0
  %254 = vmatpush1.msra.mxu0 0.0
  %255 = vmatprep.subr.mxu0 0.0
  %256 = vmatpush1.msra.mxu0 0.0
  %257 = vmatprep.subr.mxu0 0.0
  %258 = vmatpush1.msra.mxu0 0.0
  %259 = vmatprep.subr.mxu0 0.0
  %260 = vmatpush1.msra.mxu0 0.0
  %261 = vmatprep.subr.mxu0 0.0
  %262 = vmatpush1.msra.mxu0 0.0
  %263 = vmatprep.subr.mxu0 0.0
  %264 = vmatpush1.msra.mxu0 0.0
  %265 = vmatprep.mubr.f32.mxu0 0.0
  %266 = vmatmul.mubr.f32.gmra.mrb[0].mxu0 %v121
  %v267 = vpop.f32.mrb[0].mxu0
  %v268 = vadd.f32 %v197, %v267
  %v269 = vpop.f32.mrb[0].mxu0
  %v270 = vadd.f32 %v199, %v269
  %271 = vdwg.mxu0
  %v272 = vmax.f32 %v268, 0.0
  %v273 = vmax.f32 %v270, 0.0
  %v274 = vld [vmem:[%s3] sm:$0xff]
  %v275 = vld [vmem:[%s3 + $0x8] sm:$0xff]
  %v276 = vld [vmem:[%s3 + $0x10] sm:$0xff]
  %v277 = vld [vmem:[%s3 + $0x18] sm:$0xff]
  %v278 = vld [vmem:[%s3 + $0x20] sm:$0xff]
  %v279 = vld [vmem:[%s3 + $0x28] sm:$0xff]
  %v280 = vld [vmem:[%s3 + $0x30] sm:$0xff]
  %v281 = vld [vmem:[%s3 + $0x38] sm:$0xff]
  %v282 = vld [vmem:[%s3 + $0x40] sm:$0xff]
  %v283 = vld [vmem:[%s3 + $0x48] sm:$0xff]
  %v284 = vld [vmem:[%s3 + $0x50] sm:$0xff]
  %v285 = vld [vmem:[%s3 + $0x58] sm:$0xff]
  %v286 = vld [vmem:[%s3 + $0x60] sm:$0xff]
  %v287 = vld [vmem:[%s3 + $0x68] sm:$0xff]
  %v288 = vld [vmem:[%s3 + $0x70] sm:$0xff]
  %v289 = vld [vmem:[%s3 + $0x78] sm:$0xff]
  %v290 = vld [vmem:[%s3 + $0x80] sm:$0xff]
  %v291 = vld [vmem:[%s3 + $0x88] sm:$0xff]
  %v292 = vld [vmem:[%s3 + $0x90] sm:$0xff]
  %v293 = vld [vmem:[%s3 + $0x98] sm:$0xff]
  %v294 = vld [vmem:[%s3 + $0xa0] sm:$0xff]
  %v295 = vld [vmem:[%s3 + $0xa8] sm:$0xff]
  %v296 = vld [vmem:[%s3 + $0xb0] sm:$0xff]
  %v297 = vld [vmem:[%s3 + $0xb8] sm:$0xff]
  %v298 = vld [vmem:[%s3 + $0xc0] sm:$0xff]
  %v299 = vld [vmem:[%s3 + $0xc8] sm:$0xff]
  %v300 = vld [vmem:[%s3 + $0xd0] sm:$0xff]
  %v301 = vld [vmem:[%s3 + $0xd8] sm:$0xff]
  %v302 = vld [vmem:[%s3 + $0xe0] sm:$0xff]
  %v303 = vld [vmem:[%s3 + $0xe8] sm:$0xff]
  %v304 = vld [vmem:[%s3 + $0xf0] sm:$0xff]
  %v305 = vld [vmem:[%s3 + $0xf8] sm:$0xff]
  %v306 = vld [vmem:[%s4] sm:$0x1]
  %v308 = vlaneseq
  %v309 = vshrl.u32 %v308, 7
  %v310 = vsub.s32 0, %v309
  %v311 = vrot.slane %v306, %v310
  %313 = vmatprep.subr.mxu0 0.0
  %314 = vmatpush1.msra.mxu0 %v274
  %315 = vmatprep.subr.mxu0 0.0
  %316 = vmatpush1.msra.mxu0 %v275
  %317 = vmatprep.subr.mxu0 0.0
  %318 = vmatpush1.msra.mxu0 %v276
  %319 = vmatprep.subr.mxu0 0.0
  %320 = vmatpush1.msra.mxu0 %v277
  %321 = vmatprep.subr.mxu0 0.0
  %322 = vmatpush1.msra.mxu0 %v278
  %323 = vmatprep.subr.mxu0 0.0
  %324 = vmatpush1.msra.mxu0 %v279
  %325 = vmatprep.subr.mxu0 0.0
  %326 = vmatpush1.msra.mxu0 %v280
  %327 = vmatprep.subr.mxu0 0.0
  %328 = vmatpush1.msra.mxu0 %v281
  %329 = vmatprep.subr.mxu0 0.0
  %330 = vmatpush1.msra.mxu0 %v282
  %331 = vmatprep.subr.mxu0 0.0
  %332 = vmatpush1.msra.mxu0 %v283
  %333 = vmatprep.subr.mxu0 0.0
  %334 = vmatpush1.msra.mxu0 %v284
  %335 = vmatprep.subr.mxu0 0.0
  %336 = vmatpush1.msra.mxu0 %v285
  %337 = vmatprep.subr.mxu0 0.0
  %338 = vmatpush1.msra.mxu0 %v286
  %339 = vmatprep.subr.mxu0 0.0
  %340 = vmatpush1.msra.mxu0 %v287
  %341 = vmatprep.subr.mxu0 0.0
  %342 = vmatpush1.msra.mxu0 %v288
  %343 = vmatprep.subr.mxu0 0.0
  %344 = vmatpush1.msra.mxu0 %v289
  %345 = vmatprep.subr.mxu0 0.0
  %346 = vmatpush1.msra.mxu0 %v290
  %347 = vmatprep.subr.mxu0 0.0
  %348 = vmatpush1.msra.mxu0 %v291
  %349 = vmatprep.subr.mxu0 0.0
  %350 = vmatpush1.msra.mxu0 %v292
  %351 = vmatprep.subr.mxu0 0.0
  %352 = vmatpush1.msra.mxu0 %v293
  %353 = vmatprep.subr.mxu0 0.0
  %354 = vmatpush1.msra.mxu0 %v294
  %355 = vmatprep.subr.mxu0 0.0
  %356 = vmatpush1.msra.mxu0 %v295
  %357 = vmatprep.subr.mxu0 0.0
  %358 = vmatpush1.msra.mxu0 %v296
  %359 = vmatprep.subr.mxu0 0.0
  %360 = vmatpush1.msra.mxu0 %v297
  %361 = vmatprep.subr.mxu0 0.0
  %362 = vmatpush1.msra.mxu0 %v298
  %363 = vmatprep.subr.mxu0 0.0
  %364 = vmatpush1.msra.mxu0 %v299
  %365 = vmatprep.subr.mxu0 0.0
  %366 = vmatpush1.msra.mxu0 %v300
  %367 = vmatprep.subr.mxu0 0.0
  %368 = vmatpush1.msra.mxu0 %v301
  %369 = vmatprep.subr.mxu0 0.0
  %370 = vmatpush1.msra.mxu0 %v302
  %371 = vmatprep.subr.mxu0 0.0
  %372 = vmatpush1.msra.mxu0 %v303
  %373 = vmatprep.subr.mxu0 0.0
  %374 = vmatpush1.msra.mxu0 %v304
  %375 = vmatprep.subr.mxu0 0.0
  %376 = vmatpush1.msra.mxu0 %v305
  %377 = vmatprep.mubr.f32.mxu0 %v273
  %378 = vmatmul.mubr.f32.gmra.mrb[0].mxu0 %v272
  %v379 = vpop.f32.mrb[0].mxu0
  %v380 = vadd.f32 %v311, %v379
  %v381 = vpop.f32.mrb[0].mxu0
  %382 = vdwg.mxu0
  %v383 = vmax.f32 %v380, 0.0
  %v384 = vld [vmem:[%s5] sm:$0xff]
  %v385 = vld [vmem:[%s5 + $0x8] sm:$0xff]
  %v386 = vld [vmem:[%s5 + $0x10] sm:$0xff]
  %v387 = vld [vmem:[%s5 + $0x18] sm:$0xff]
  %v388 = vld [vmem:[%s5 + $0x20] sm:$0xff]
  %v389 = vld [vmem:[%s5 + $0x28] sm:$0xff]
  %v390 = vld [vmem:[%s5 + $0x30] sm:$0xff]
  %v391 = vld [vmem:[%s5 + $0x38] sm:$0xff]
  %v392 = vld [vmem:[%s5 + $0x40] sm:$0xff]
  %v393 = vld [vmem:[%s5 + $0x48] sm:$0xff]
  %v394 = vld [vmem:[%s5 + $0x50] sm:$0xff]
  %v395 = vld [vmem:[%s5 + $0x58] sm:$0xff]
  %v396 = vld [vmem:[%s5 + $0x60] sm:$0xff]
  %v397 = vld [vmem:[%s5 + $0x68] sm:$0xff]
  %v398 = vld [vmem:[%s5 + $0x70] sm:$0xff]
  %v399 = vld [vmem:[%s5 + $0x78] sm:$0xff]
  %v400 = vld [vmem:[%s6] sm:$0x1]
  %v402 = vlaneseq
  %v403 = vshrl.u32 %v402, 7
  %v404 = vsub.s32 0, %v403
  %v405 = vrot.slane %v400, %v404
  %407 = vmatprep.subr.mxu0 0.0
  %408 = vmatpush1.msra.mxu0 %v384
  %409 = vmatprep.subr.mxu0 0.0
  %410 = vmatpush1.msra.mxu0 %v385
  %411 = vmatprep.subr.mxu0 0.0
  %412 = vmatpush1.msra.mxu0 %v386
  %413 = vmatprep.subr.mxu0 0.0
  %414 = vmatpush1.msra.mxu0 %v387
  %415 = vmatprep.subr.mxu0 0.0
  %416 = vmatpush1.msra.mxu0 %v388
  %417 = vmatprep.subr.mxu0 0.0
  %418 = vmatpush1.msra.mxu0 %v389
  %419 = vmatprep.subr.mxu0 0.0
  %420 = vmatpush1.msra.mxu0 %v390
  %421 = vmatprep.subr.mxu0 0.0
  %422 = vmatpush1.msra.mxu0 %v391
  %423 = vmatprep.subr.mxu0 0.0
  %424 = vmatpush1.msra.mxu0 %v392
  %425 = vmatprep.subr.mxu0 0.0
  %426 = vmatpush1.msra.mxu0 %v393
  %427 = vmatprep.subr.mxu0 0.0
  %428 = vmatpush1.msra.mxu0 %v394
  %429 = vmatprep.subr.mxu0 0.0
  %430 = vmatpush1.msra.mxu0 %v395
  %431 = vmatprep.subr.mxu0 0.0
  %432 = vmatpush1.msra.mxu0 %v396
  %433 = vmatprep.subr.mxu0 0.0
  %434 = vmatpush1.msra.mxu0 %v397
  %435 = vmatprep.subr.mxu0 0.0
  %436 = vmatpush1.msra.mxu0 %v398
  %437 = vmatprep.subr.mxu0 0.0
  %438 = vmatpush1.msra.mxu0 %v399
  %439 = vmatprep.subr.mxu0 0.0
  %440 = vmatpush1.msra.mxu0 0.0
  %441 = vmatprep.subr.mxu0 0.0
  %442 = vmatpush1.msra.mxu0 0.0
  %443 = vmatprep.subr.mxu0 0.0
  %444 = vmatpush1.msra.mxu0 0.0
  %445 = vmatprep.subr.mxu0 0.0
  %446 = vmatpush1.msra.mxu0 0.0
  %447 = vmatprep.subr.mxu0 0.0
  %448 = vmatpush1.msra.mxu0 0.0
  %449 = vmatprep.subr.mxu0 0.0
  %450 = vmatpush1.msra.mxu0 0.0
  %451 = vmatprep.subr.mxu0 0.0
  %452 = vmatpush1.msra.mxu0 0.0
  %453 = vmatprep.subr.mxu0 0.0
  %454 = vmatpush1.msra.mxu0 0.0
  %455 = vmatprep.subr.mxu0 0.0
  %456 = vmatpush1.msra.mxu0 0.0
  %457 = vmatprep.subr.mxu0 0.0
  %458 = vmatpush1.msra.mxu0 0.0
  %459 = vmatprep.subr.mxu0 0.0
  %460 = vmatpush1.msra.mxu0 0.0
  %461 = vmatprep.subr.mxu0 0.0
  %462 = vmatpush1.msra.mxu0 0.0
  %463 = vmatprep.subr.mxu0 0.0
  %464 = vmatpush1.msra.mxu0 0.0
  %465 = vmatprep.subr.mxu0 0.0
  %466 = vmatpush1.msra.mxu0 0.0
  %467 = vmatprep.subr.mxu0 0.0
  %468 = vmatpush1.msra.mxu0 0.0
  %469 = vmatprep.subr.mxu0 0.0
  %470 = vmatpush1.msra.mxu0 0.0
  %471 = vmatprep.mubr.f32.mxu0 0.0
  %472 = vmatmul.mubr.f32.gmra.mrb[0].mxu0 %v383
  %v473 = vpop.f32.mrb[0].mxu0
  %v474 = vadd.f32 %v405, %v473
  %v475 = vpop.f32.mrb[0].mxu0
  %476 = vdwg.mxu0
  %477 = vst [vmem:[%s7] sm:$0xff] %v474
  // Predicated region
  $region30: #{cnn_forward_pallas.1} parent=0 // pred_check
    _
  $region31: #{cnn_forward_pallas.1} parent=0 // pred_check_branch
    %479 = sbr.rel (0) target = $region33
  $region32: #{cnn_forward_pallas.1} parent=0 // pred_region
    _
  $region33: #{cnn_forward_pallas.1} parent=0 // pred_fallthru
    _
  // Predicated region
  $region34: #{cnn_forward_pallas.1} parent=0 // pred_check
    _
  $region35: #{cnn_forward_pallas.1} parent=0 // pred_check_branch
    %481 = sbr.rel (0) target = $region37
  $region36: #{cnn_forward_pallas.1} parent=0 // pred_region
    _
  $region37: #{cnn_forward_pallas.1} parent=0 // pred_fallthru
    _

</llo_original>
